<compile_context>
chip_gen: v5e
topology: v5e:2x2
jax: 0.10.0
libtpu: 0.0.40
codegen_flags: <defaults>
</compile_context>

<pallas_src>
import numpy as np
import jax
import jax.numpy as jnp
from jax.experimental import pallas as pl
from jax.experimental.pallas import tpu as pltpu

BN_EPS = 1e-5


def _round_up(x, m):
    return (x + m - 1) // m * m


def _conv_relu_pool_stats_kernel(x_ref, w_ref, pooled_ref, stat_ref):
    """Per lane-tile: 1x1 conv + ReLU + 2x2 pool-sum (pre-BN) + partial BN statistics.

    x_ref      : (4, Cin, TM)  the 4 taps of each 2x2 window; lanes = pooled positions
    w_ref      : (Cout, Cin)   1x1 conv weight (PyTorch layout)
    pooled_ref : (Cout, TM)    sum_p relu(w @ x_p), stored bf16 (1/4 folded into scale)
    stat_ref   : (1, Cout, 2)  per-tile [sum, sum-of-squares] of relu(conv) activations
    """
    w = w_ref[...]
    acc = jnp.zeros(pooled_ref.shape, jnp.float32)
    sqa = jnp.zeros(pooled_ref.shape, jnp.float32)
    for p in range(4):  # static unroll over the 2x2 window taps
        y = jnp.dot(w, x_ref[p], preferred_element_type=jnp.float32)  # MXU
        y = jnp.maximum(y, 0.0)                                       # VPU
        acc = acc + y
        sqa = sqa + y * y
    pooled_ref[...] = acc.astype(pooled_ref.dtype)
    # Only two XLU lane-reductions per tile (tap-sum commutes with the lane reduce).
    s = jnp.sum(acc, axis=1, keepdims=True)      # (Cout, 1)
    sq = jnp.sum(sqa, axis=1, keepdims=True)     # (Cout, 1)
    stat_ref[...] = jnp.concatenate([s, sq], axis=1)[None]   # single (Cout, 2) store


def transition_block(x_nchw, conv_w, gamma, beta, *, matmul_dtype=jnp.bfloat16,
                     vmem_block_budget=4 << 20):
    """x_nchw: (N, Cin, H, W); conv_w: (Cout, Cin) or (Cout, Cin, 1, 1);
    gamma/beta: (Cout,). Returns (N, Cout, H//2, W//2) float32 (training-mode BN)."""
    N, Cin, H, W = x_nchw.shape
    assert H % 2 == 0 and W % 2 == 0, "AvgPool2d(2,2) requires even H, W"
    conv_w = conv_w.reshape(conv_w.shape[0], -1)          # squeeze 1x1 kernel dims
    Cout = conv_w.shape[0]
    assert conv_w.shape[1] == Cin
    Ho, Wo = H // 2, W // 2
    Mo = N * Ho * Wo                                      # pooled spatial positions
    M = N * H * W                                         # full-res count for BN stats

    # ---- single-copy layout glue: f32 NCHW -> bf16 (4, Cin, Mo).
    # axes of the reshape: (n, c, oh, ph, ow, pw); tap index = ph*2 + pw; columns of
    # Mo are (n, oh, ow) row-major (so the final reshape to NCHW needs no re-ordering
    # beyond the N<->Cout transpose).  One XLA copy reading f32, writing bf16.
    x4 = (x_nchw.astype(matmul_dtype)
          .reshape(N, Cin, Ho, 2, Wo, 2)
          .transpose(3, 5, 1, 0, 2, 4)
          .reshape(4, Cin, Mo))

    # ---- lane-tile size: multiple of 128, honest VMEM accounting (double-buffered
    # bf16 inputs with sublane padding, double-buffered bf16 output, f32 temporaries).
    in_bytes = jnp.dtype(matmul_dtype).itemsize
    cin_sub = _round_up(Cin, 16 if in_bytes == 2 else 8)
    cout_sub = _round_up(Cout, 8)
    bytes_per_col = (2 * 4 * cin_sub * in_bytes        # x block (2 pipeline buffers)
                     + 2 * cout_sub * 2                # pooled bf16 out (2 buffers)
                     + 4 * cout_sub * 4)               # y, y*y, acc, sqa f32 live regs
    TM_budget = max(128, min(32768, (int(vmem_block_budget) // bytes_per_col)
                             // 128 * 128))
    # Aim for >= 4 grid steps once Mo is big enough so the "parallel" axis can shard
    # across v7x's two TensorCores (at the tiny test shape Mo=128 -> G=1, nothing to
    # split anyway).
    TM_target = max(512, _round_up(-(-Mo // 4), 128))
    TM = min(TM_budget, TM_target, _round_up(Mo, 128))
    Mo_pad = _round_up(Mo, TM)
    G = Mo_pad // TM

    # Zero padding is harmless: relu(w @ 0) == 0 contributes nothing to sum / sumsq
    # (we divide by the true M), and padded output columns are sliced off below.
    if Mo_pad != Mo:
        x4 = jnp.pad(x4, ((0, 0), (0, 0), (0, Mo_pad - Mo)))
    w = conv_w.astype(matmul_dtype)                       # (Cout, Cin)

    cost = pl.CostEstimate(
        flops=2 * 4 * Mo_pad * Cin * Cout,
        transcendentals=0,
        bytes_accessed=(4 * Cin * Mo_pad * in_bytes + Cout * Cin * in_bytes
                        + Mo_pad * Cout * 2 + G * Cout * 2 * 4))

    pooled, stats = pl.pallas_call(
        _conv_relu_pool_stats_kernel,
        out_shape=(jax.ShapeDtypeStruct((Cout, Mo_pad), jnp.bfloat16),
                   jax.ShapeDtypeStruct((G, Cout, 2), jnp.float32)),
        grid=(G,),
        in_specs=[pl.BlockSpec((4, Cin, TM), lambda i: (0, 0, i)),
                  pl.BlockSpec((Cout, Cin), lambda i: (0, 0))],
        out_specs=(pl.BlockSpec((Cout, TM), lambda i: (0, i)),
                   pl.BlockSpec((1, Cout, 2), lambda i: (i, 0, 0))),
        compiler_params=pltpu.CompilerParams(
            dimension_semantics=("parallel",),            # megacore-splittable on v7x
            vmem_limit_bytes=32 * 1024 * 1024),
        cost_estimate=cost,
    )(x4, w)

    # ---- tiny O(G*Cout) cross-tile reduction + training-mode BN coefficients
    # (biased variance, one-pass E[y^2] - E[y]^2 in f32), folded into scale/bias; the
    # 2x2 avg-pool's 0.25 is folded into the scale (pooled holds the un-divided sum).
    total = jnp.sum(stats, axis=0)                        # (Cout, 2)
    mean = total[:, 0:1] / M                              # (Cout, 1)
    var = total[:, 1:2] / M - mean * mean
    s0 = gamma.reshape(Cout, 1).astype(jnp.float32) * jax.lax.rsqrt(var + BN_EPS)
    bias = beta.reshape(Cout, 1).astype(jnp.float32) - mean * s0
    scale = 0.25 * s0

    # Affine + slice + NCHW transpose fuse into one XLA pass over the pooled tensor
    # (no second Pallas pass / no extra HBM round-trip).
    out = pooled[:, :Mo].astype(jnp.float32) * scale + bias
    return out.reshape(Cout, N, Ho, Wo).transpose(1, 0, 2, 3)


def _reference(x_nchw, conv_w, gamma, beta):
    # Pure-JAX f32 reference of the PyTorch forward (training-mode BatchNorm).
    y = jnp.einsum("oc,nchw->nohw", conv_w, x_nchw)
    y = jnp.maximum(y, 0.0)
    mean = y.mean(axis=(0, 2, 3), keepdims=True)
    var = jnp.square(y - mean).mean(axis=(0, 2, 3), keepdims=True)
    y_hat = (y - mean) / jnp.sqrt(var + BN_EPS)
    y_hat = y_hat * gamma.reshape(1, -1, 1, 1) + beta.reshape(1, -1, 1, 1)
    N, C, H, W = y_hat.shape
    return y_hat.reshape(N, C, H // 2, 2, W // 2, 2).mean(axis=(3, 5))


if __name__ == "__main__":
    N, Cin, Cout, H, W = 2, 8, 16, 16, 16

    key = jax.random.PRNGKey(0)
    kx, kw, kg, kb = jax.random.split(key, 4)

    x = jax.random.normal(kx, (N, Cin, H, W), dtype=jnp.float32)
    # Conv2d(in, out, kernel_size=1, bias=False): weight layout (Cout, Cin, 1, 1).
    conv_w = jax.random.normal(kw, (Cout, Cin, 1, 1), dtype=jnp.float32) * (1.0 / np.sqrt(Cin))
    gamma = 1.0 + 0.1 * jax.random.normal(kg, (Cout,), dtype=jnp.float32)
    beta = 0.1 * jax.random.normal(kb, (Cout,), dtype=jnp.float32)

    out = jax.jit(transition_block)(x, conv_w, gamma, beta)
    out = jax.block_until_ready(out)

    ref = _reference(x, conv_w.reshape(Cout, Cin), gamma, beta)
    assert out.shape == (N, Cout, H // 2, W // 2), out.shape
    # Tolerance accounts for the bf16 matmul inputs and bf16 pooled intermediate
    # (statistics and accumulation stay f32).
    np.testing.assert_allclose(np.asarray(out), np.asarray(ref), rtol=2e-2, atol=2e-2)

    print("KERNEL_OK")
</pallas_src>

<mosaic_0001>
module attributes {stable_mosaic.version = 11 : i64} {
  func.func @_conv_relu_pool_stats_kernel(%arg0: i32, %arg1: memref<4x8x128xbf16, #tpu.memory_space<vmem>>, %arg2: memref<16x8xbf16, #tpu.memory_space<vmem>>, %arg3: memref<16x128xbf16, #tpu.memory_space<vmem>>, %arg4: memref<1x16x2xf32, #tpu.memory_space<vmem>>) attributes {dimension_semantics = [#tpu.dimension_semantics<parallel>], iteration_bounds = array<i64: 1>, scalar_prefetch = 0 : i64, scratch_operands = 0 : i64, tpu.core_type = #tpu.core_type<tc>, window_params = [{transform_indices = @transform_0, window_bounds = array<i64: 4, 8, 128>}, {pipeline_mode = #tpu.pipeline_mode<synchronous>, transform_indices = @transform_1, window_bounds = array<i64: 16, 8>}, {transform_indices = @transform_2, window_bounds = array<i64: 16, 128>}, {transform_indices = @transform_3, window_bounds = array<i64: 1, 16, 2>}]} {
    %c0 = arith.constant 0 : index
    %c0_0 = arith.constant 0 : index
    %0 = vector.load %arg2[%c0, %c0_0] : memref<16x8xbf16, #tpu.memory_space<vmem>>, vector<16x8xbf16>
    %cst = arith.constant 0.000000e+00 : f32
    %1 = vector.broadcast %cst : f32 to vector<16x128xf32>
    %cst_1 = arith.constant 0.000000e+00 : f32
    %2 = vector.broadcast %cst_1 : f32 to vector<16x128xf32>
    %c0_2 = arith.constant 0 : index
    %c0_3 = arith.constant 0 : index
    %c0_4 = arith.constant 0 : index
    %3 = vector.load %arg1[%c0_2, %c0_3, %c0_4] : memref<4x8x128xbf16, #tpu.memory_space<vmem>>, vector<1x8x128xbf16>
    %4 = vector.shape_cast %3 : vector<1x8x128xbf16> to vector<8x128xbf16>
    %cst_5 = arith.constant dense<0.000000e+00> : vector<16x128xf32>
    %5 = tpu.matmul %0, %4, %cst_5 {dimension_numbers = #tpu.dot_dimension_numbers<[1], [0], [0], [1], [0, 0, 1, 1], [], []>} : vector<16x8xbf16>, vector<8x128xbf16>, vector<16x128xf32> -> vector<16x128xf32>
    %cst_6 = arith.constant 0.000000e+00 : f32
    %6 = vector.broadcast %cst_6 : f32 to vector<16x128xf32>
    %7 = arith.maximumf %5, %6 : vector<16x128xf32>
    %8 = arith.addf %1, %7 : vector<16x128xf32>
    %9 = arith.mulf %7, %7 : vector<16x128xf32>
    %10 = arith.addf %2, %9 : vector<16x128xf32>
    %c1 = arith.constant 1 : index
    %c0_7 = arith.constant 0 : index
    %c0_8 = arith.constant 0 : index
    %11 = vector.load %arg1[%c1, %c0_7, %c0_8] : memref<4x8x128xbf16, #tpu.memory_space<vmem>>, vector<1x8x128xbf16>
    %12 = vector.shape_cast %11 : vector<1x8x128xbf16> to vector<8x128xbf16>
    %cst_9 = arith.constant dense<0.000000e+00> : vector<16x128xf32>
    %13 = tpu.matmul %0, %12, %cst_9 {dimension_numbers = #tpu.dot_dimension_numbers<[1], [0], [0], [1], [0, 0, 1, 1], [], []>} : vector<16x8xbf16>, vector<8x128xbf16>, vector<16x128xf32> -> vector<16x128xf32>
    %cst_10 = arith.constant 0.000000e+00 : f32
    %14 = vector.broadcast %cst_10 : f32 to vector<16x128xf32>
    %15 = arith.maximumf %13, %14 : vector<16x128xf32>
    %16 = arith.addf %8, %15 : vector<16x128xf32>
    %17 = arith.mulf %15, %15 : vector<16x128xf32>
    %18 = arith.addf %10, %17 : vector<16x128xf32>
    %c2 = arith.constant 2 : index
    %c0_11 = arith.constant 0 : index
    %c0_12 = arith.constant 0 : index
    %19 = vector.load %arg1[%c2, %c0_11, %c0_12] : memref<4x8x128xbf16, #tpu.memory_space<vmem>>, vector<1x8x128xbf16>
    %20 = vector.shape_cast %19 : vector<1x8x128xbf16> to vector<8x128xbf16>
    %cst_13 = arith.constant dense<0.000000e+00> : vector<16x128xf32>
    %21 = tpu.matmul %0, %20, %cst_13 {dimension_numbers = #tpu.dot_dimension_numbers<[1], [0], [0], [1], [0, 0, 1, 1], [], []>} : vector<16x8xbf16>, vector<8x128xbf16>, vector<16x128xf32> -> vector<16x128xf32>
    %cst_14 = arith.constant 0.000000e+00 : f32
    %22 = vector.broadcast %cst_14 : f32 to vector<16x128xf32>
    %23 = arith.maximumf %21, %22 : vector<16x128xf32>
    %24 = arith.addf %16, %23 : vector<16x128xf32>
    %25 = arith.mulf %23, %23 : vector<16x128xf32>
    %26 = arith.addf %18, %25 : vector<16x128xf32>
    %c3 = arith.constant 3 : index
    %c0_15 = arith.constant 0 : index
    %c0_16 = arith.constant 0 : index
    %27 = vector.load %arg1[%c3, %c0_15, %c0_16] : memref<4x8x128xbf16, #tpu.memory_space<vmem>>, vector<1x8x128xbf16>
    %28 = vector.shape_cast %27 : vector<1x8x128xbf16> to vector<8x128xbf16>
    %cst_17 = arith.constant dense<0.000000e+00> : vector<16x128xf32>
    %29 = tpu.matmul %0, %28, %cst_17 {dimension_numbers = #tpu.dot_dimension_numbers<[1], [0], [0], [1], [0, 0, 1, 1], [], []>} : vector<16x8xbf16>, vector<8x128xbf16>, vector<16x128xf32> -> vector<16x128xf32>
    %cst_18 = arith.constant 0.000000e+00 : f32
    %30 = vector.broadcast %cst_18 : f32 to vector<16x128xf32>
    %31 = arith.maximumf %29, %30 : vector<16x128xf32>
    %32 = arith.addf %24, %31 : vector<16x128xf32>
    %33 = arith.mulf %31, %31 : vector<16x128xf32>
    %34 = arith.addf %26, %33 : vector<16x128xf32>
    %35 = arith.truncf %32 : vector<16x128xf32> to vector<16x128xbf16>
    %c0_19 = arith.constant 0 : index
    %c0_20 = arith.constant 0 : index
    %36 = vector.load %arg3[%c0_19, %c0_20] : memref<16x128xbf16, #tpu.memory_space<vmem>>, vector<16x128xbf16>
    tpu.vector_store %arg3[%c0_19, %c0_20], %35 {strides = array<i32>} : memref<16x128xbf16, #tpu.memory_space<vmem>>, vector<16x128xbf16>,
    %cst_21 = arith.constant dense<0.000000e+00> : vector<16xf32>
    %37 = vector.multi_reduction <add>, %32, %cst_21 [1] : vector<16x128xf32> to vector<16xf32>
    %38 = vector.shape_cast %37 : vector<16xf32> to vector<16x1xf32>
    %cst_22 = arith.constant dense<0.000000e+00> : vector<16xf32>
    %39 = vector.multi_reduction <add>, %34, %cst_22 [1] : vector<16x128xf32> to vector<16xf32>
    %40 = vector.shape_cast %39 : vector<16xf32> to vector<16x1xf32>
    %41 = tpu.concatenate %38, %40 in 1 : vector<16x1xf32>, vector<16x1xf32> -> vector<16x2xf32>
    %42 = vector.shape_cast %41 : vector<16x2xf32> to vector<1x16x2xf32>
    %c0_23 = arith.constant 0 : index
    %c0_24 = arith.constant 0 : index
    %c0_25 = arith.constant 0 : index
    %43 = vector.load %arg4[%c0_23, %c0_24, %c0_25] : memref<1x16x2xf32, #tpu.memory_space<vmem>>, vector<1x16x2xf32>
    tpu.vector_store %arg4[%c0_23, %c0_24, %c0_25], %42 {strides = array<i32>} : memref<1x16x2xf32, #tpu.memory_space<vmem>>, vector<1x16x2xf32>,
    return
  }
  func.func @transform_0(%arg0: i32) -> (i32, i32, i32) {
    %c0_i32 = arith.constant 0 : i32
    %c0_i32_0 = arith.constant 0 : i32
    %c0_i32_1 = arith.constant 0 : i32
    return %c0_i32, %c0_i32_0, %arg0 : i32, i32, i32
  }
  func.func @transform_1(%arg0: i32) -> (i32, i32) {
    %c0_i32 = arith.constant 0 : i32
    %c0_i32_0 = arith.constant 0 : i32
    %c0_i32_1 = arith.constant 0 : i32
    return %c0_i32, %c0_i32_0 : i32, i32
  }
  func.func @transform_2(%arg0: i32) -> (i32, i32) {
    %c0_i32 = arith.constant 0 : i32
    %c0_i32_0 = arith.constant 0 : i32
    return %c0_i32, %arg0 : i32, i32
  }
  func.func @transform_3(%arg0: i32) -> (i32, i32, i32) {
    %c0_i32 = arith.constant 0 : i32
    %c0_i32_0 = arith.constant 0 : i32
    %c0_i32_1 = arith.constant 0 : i32
    return %arg0, %c0_i32, %c0_i32_0 : i32, i32, i32
  }
}

</mosaic_0001>

<llo_original>
// kernel: transition_block.1
$region0: #{transition_block.1}
  #allocation0 [shape = 'u32[]', space=smem, size = 0x4, offset = 0x4, fixed_abs, tag = 'smem constant byte address 0x4 - core index']
  #allocation1 [shape = 'u32[72,128]{1,0:T(1,128)}', space=vmem, size = 0x9000, scoped, tag = 'internal scratch']
  %s0 = inlined_call_operand.vmem [shape: bf16[4,8,128], index: 0, kind: input, shape index: {}]
  %s1 = inlined_call_operand.vmem [shape: bf16[16,8], index: 1, kind: input, shape index: {}]
  %s2 = inlined_call_operand.vmem [shape: bf16[16,128], index: 2, kind: output, shape index: {0}]
  %s3 = inlined_call_operand.vmem [shape: f32[1,16,2], index: 3, kind: output, shape index: {1}]
  %4 = xla_tuple %s2, %s3
  %s5 = sld [smem:[#allocation0]]
  $region26: #{transition_block.1} parent=0
    _
  %s7 = ssub.s32 1, %s5
  %s8 = scalar_select 0, %s7, %s5
  // Predicated region
  $region2: #{transition_block.1} parent=0 // pred_check
    _
  $region3: #{transition_block.1} parent=0 // pred_check_branch
    %10 = sbr.rel (0) target = $region5
  $region4: #{transition_block.1} parent=0 // pred_region
    _
  $region5: #{transition_block.1} parent=0 // pred_fallthru
    _
  // Predicated region
  $region6: #{transition_block.1} parent=0 // pred_check
    _
  $region7: #{transition_block.1} parent=0 // pred_check_branch
    %12 = sbr.rel (0) target = $region9
  $region8: #{transition_block.1} parent=0 // pred_region
    _
  $region9: #{transition_block.1} parent=0 // pred_fallthru
    _
  %v14 = vld [vmem:[%s1] sm:$0xf]
  %v15 = vld [vmem:[%s1 + $0x4] sm:$0xf]
  %v16 = vld [vmem:[%s0] sm:$0xf]
  %v19 = vunpack.c.l.b16 %v14
  %v20 = vunpack.c.l.b16 %v15
  %v21 = vpack.c.b16 %v20, %v19
  %vm22 = vcmask 64512
  %v24 = vsel %vm22, %v21, 0
  %vm26 = vcmask 1043456
  %v28 = vsel %vm26, %v16, 0
  %30 = vmatpush.bf16.msra.mxu0 0
  %31 = vmatpush.bf16.msra.mxu0 0
  %32 = vmatpush.bf16.msra.mxu0 0
  %33 = vmatpush.bf16.msra.mxu0 0
  %34 = vmatpush.bf16.msra.mxu0 0
  %35 = vmatpush.bf16.msra.mxu0 0
  %36 = vmatpush.bf16.msra.mxu0 0
  %37 = vmatpush.bf16.msra.mxu0 %v28
  %38 = vmatmul.bf16.gmra.mxu0 %v24
  %v39 = vpop.f32.mrf.mxu0
  %v40 = vadd.f32 0.0, %v39
  %v41 = vpop.f32.mrf.mxu0
  %v42 = vadd.f32 0.0, %v41
  %43 = vdwg.mxu0
  %v44 = vmax.f32 %v40, 0.0
  %v45 = vmax.f32 %v42, 0.0
  %v46 = vadd.f32 %v44, 0.0
  %v47 = vadd.f32 %v45, 0.0
  %v48 = vmul.f32 %v44, %v44
  %v49 = vmul.f32 %v45, %v45
  %v50 = vadd.f32 %v48, 0.0
  %v51 = vadd.f32 %v49, 0.0
  %s52 = scalar_lea.vmem %s0, 4
  %v53 = vld [vmem:[%s52] sm:$0xf]
  %v55 = vsel %vm26, %v53, 0
  %57 = vmatpush.bf16.msra.mxu0 0
  %58 = vmatpush.bf16.msra.mxu0 0
  %59 = vmatpush.bf16.msra.mxu0 0
  %60 = vmatpush.bf16.msra.mxu0 0
  %61 = vmatpush.bf16.msra.mxu0 0
  %62 = vmatpush.bf16.msra.mxu0 0
  %63 = vmatpush.bf16.msra.mxu0 0
  %64 = vmatpush.bf16.msra.mxu0 %v55
  %65 = vmatmul.bf16.gmra.mxu0 %v24
  %v66 = vpop.f32.mrf.mxu0
  %v67 = vadd.f32 0.0, %v66
  %v68 = vpop.f32.mrf.mxu0
  %v69 = vadd.f32 0.0, %v68
  %70 = vdwg.mxu0
  %v71 = vmax.f32 %v67, 0.0
  %v72 = vmax.f32 %v69, 0.0
  %v73 = vadd.f32 %v46, %v71
  %v74 = vadd.f32 %v47, %v72
  %v75 = vmul.f32 %v71, %v71
  %v76 = vmul.f32 %v72, %v72
  %v77 = vadd.f32 %v50, %v75
  %v78 = vadd.f32 %v51, %v76
  %s79 = scalar_lea.vmem %s0, 8
  %v80 = vld [vmem:[%s79] sm:$0xf]
  %v82 = vsel %vm26, %v80, 0
  %84 = vmatpush.bf16.msra.mxu0 0
  %85 = vmatpush.bf16.msra.mxu0 0
  %86 = vmatpush.bf16.msra.mxu0 0
  %87 = vmatpush.bf16.msra.mxu0 0
  %88 = vmatpush.bf16.msra.mxu0 0
  %89 = vmatpush.bf16.msra.mxu0 0
  %90 = vmatpush.bf16.msra.mxu0 0
  %91 = vmatpush.bf16.msra.mxu0 %v82
  %92 = vmatmul.bf16.gmra.mxu0 %v24
  %v93 = vpop.f32.mrf.mxu0
  %v94 = vadd.f32 0.0, %v93
  %v95 = vpop.f32.mrf.mxu0
  %v96 = vadd.f32 0.0, %v95
  %97 = vdwg.mxu0
  %v98 = vmax.f32 %v94, 0.0
  %v99 = vmax.f32 %v96, 0.0
  %v100 = vadd.f32 %v73, %v98
  %v101 = vadd.f32 %v74, %v99
  %v102 = vmul.f32 %v98, %v98
  %v103 = vmul.f32 %v99, %v99
  %v104 = vadd.f32 %v77, %v102
  %v105 = vadd.f32 %v78, %v103
  %s106 = scalar_lea.vmem %s0, 12
  %v107 = vld [vmem:[%s106] sm:$0xf]
  %v109 = vsel %vm26, %v107, 0
  %111 = vmatpush.bf16.msra.mxu0 0
  %112 = vmatpush.bf16.msra.mxu0 0
  %113 = vmatpush.bf16.msra.mxu0 0
  %114 = vmatpush.bf16.msra.mxu0 0
  %115 = vmatpush.bf16.msra.mxu0 0
  %116 = vmatpush.bf16.msra.mxu0 0
  %117 = vmatpush.bf16.msra.mxu0 0
  %118 = vmatpush.bf16.msra.mxu0 %v109
  %119 = vmatmul.bf16.gmra.mxu0 %v24
  %v120 = vpop.f32.mrf.mxu0
  %v121 = vadd.f32 0.0, %v120
  %v122 = vpop.f32.mrf.mxu0
  %v123 = vadd.f32 0.0, %v122
  %124 = vdwg.mxu0
  %v125 = vmax.f32 %v121, 0.0
  %v126 = vmax.f32 %v123, 0.0
  %v127 = vadd.f32 %v100, %v125
  %v128 = vadd.f32 %v101, %v126
  %v129 = vmul.f32 %v125, %v125
  %v130 = vmul.f32 %v126, %v126
  %v131 = vadd.f32 %v104, %v129
  %v132 = vadd.f32 %v105, %v130
  %v133 = vpack.c.bf16 %v127, %v127
  %v134 = vpack.c.bf16 %v128, %v128
  %135 = vst [vmem:[%s2] sm:$0xf] %v133
  %136 = vst [vmem:[%s2 + $0x4] sm:$0xf] %v134
  %137 = vadd.xlane.f32.xlu0 %v127
  %v138 = vpop.xlane.xlu0 %137
  %139 = vadd.xlane.f32.xlu0 %v128
  %v140 = vpop.xlane.xlu0 %139
  %141 = vadd.xlane.f32.xlu0 %v131
  %v142 = vpop.xlane.xlu0 %141
  %143 = vadd.xlane.f32.xlu0 %v132
  %v144 = vpop.xlane.xlu0 %143
  %vm145 = vcmask 7168
  %v146 = vsel %vm145, %v138, %v142
  %v147 = vsel %vm145, %v140, %v144
  %vm148 = vcmask 15360
  %149 = vst.msk [vmem:[%s3] sm:$0xff] %vm148, %v146
  %150 = vst.msk [vmem:[%s3 + $0x8] sm:$0xff] %vm148, %v147
  // Predicated region
  $region10: #{transition_block.1} parent=0 // pred_check
    _
  $region11: #{transition_block.1} parent=0 // pred_check_branch
    %152 = sbr.rel (0) target = $region13
  $region12: #{transition_block.1} parent=0 // pred_region
    _
  $region13: #{transition_block.1} parent=0 // pred_fallthru
    _
  // Predicated region
  $region14: #{transition_block.1} parent=0 // pred_check
    _
  $region15: #{transition_block.1} parent=0 // pred_check_branch
    %154 = sbr.rel (0) target = $region17
  $region16: #{transition_block.1} parent=0 // pred_region
    _
  $region17: #{transition_block.1} parent=0 // pred_fallthru
    _
  // Predicated region
  $region18: #{transition_block.1} parent=0 // pred_check
    _
  $region19: #{transition_block.1} parent=0 // pred_check_branch
    %156 = sbr.rel (0) target = $region21
  $region20: #{transition_block.1} parent=0 // pred_region
    _
  $region21: #{transition_block.1} parent=0 // pred_fallthru
    _
  // Predicated region
  $region22: #{transition_block.1} parent=0 // pred_check
    _
  $region23: #{transition_block.1} parent=0 // pred_check_branch
    %158 = sbr.rel (0) target = $region25
  $region24: #{transition_block.1} parent=0 // pred_region
    _
  $region25: #{transition_block.1} parent=0 // pred_fallthru
    _

</llo_original>
